<compile_context>
chip_gen: v7x
topology: tpu7x:2x2x1
jax: 0.10.0
libtpu: 0.0.40
codegen_flags: <defaults>
</compile_context>

<pallas_src>
import functools

import jax
import jax.numpy as jnp
from jax.experimental import pallas as pl
from jax.experimental.pallas import tpu as pltpu

# ---- deterministic "parameters" (module __init__ defaults / simple cfg) ----
ORIGIN = (0.1, -0.2, 0.3)          # cfg.origin
DIRECTION_MULTIPLIER = 1.5         # cfg.direction_multiplier
MOMENT_MULTIPLIER = 0.75           # cfg.moment_multiplier
EPS = 1e-12                        # torch.nn.functional.normalize eps
LANE = 128

# Tiling / VMEM policy (portable across v5e / v6e / v7x):
DEFAULT_TILE_ROWS = 1024           # 6*1024*128*4 B = 3 MiB per buffer
MAX_TILE_ROWS = 2048               # keeps double-buffered in+out <= ~24 MiB
VMEM_LIMIT_BYTES = 32 << 20        # explicit: v5e default (16 MiB) is too small
                                   # for >=512-row tiles; v7x physical is 64 MiB

# TODO(synk): RayParam.dummy_layer = nn.Linear(1, 1) is never used in forward;
# it is intentionally not materialized here.
# TODO(synk): use_local_param=True branch (voxel-local origin) not implemented
# (config default is False).
# TODO(synk): optional bf16 ray/moment I/O (keep f32 math in-kernel) would halve
# HBM traffic if the consumer tolerates it; left at f32 for exact parity.


def _round_up(x, m):
    return ((x + m - 1) // m) * m


def _pluecker_kernel(r_ref, o_ref, *, origin, dir_mul, mom_mul):
    # r_ref/o_ref: (6, TR, 128) f32 blocks; channels = [ox, oy, oz, dx, dy, dz]
    ox = r_ref[0] - origin[0]          # (TR, 128) dense slabs
    oy = r_ref[1] - origin[1]
    oz = r_ref[2] - origin[2]
    dx = r_ref[3]
    dy = r_ref[4]
    dz = r_ref[5]

    # L2 normalize direction. torch: d / max(||d||, eps)  ==  d * rsqrt(max(||d||^2, eps^2))
    # rsqrt runs on the EUP (its own VLIW slot), avoiding a VALU divide chain.
    sumsq = dx * dx + dy * dy + dz * dz
    inv = jax.lax.rsqrt(jnp.maximum(sumsq, EPS * EPS))

    # Fold multipliers into the inverse norm; cross product on unnormalized d,
    # scaled once by s_m (cross is bilinear, so this equals cross(o, d_norm)*mom_mul).
    s_d = inv * dir_mul
    s_m = inv * mom_mul

    # Direct per-channel stores: full-lane unmasked vst, no concatenate/relayout.
    o_ref[0] = dx * s_d
    o_ref[1] = dy * s_d
    o_ref[2] = dz * s_d
    o_ref[3] = (oy * dz - oz * dy) * s_m
    o_ref[4] = (oz * dx - ox * dz) * s_m
    o_ref[5] = (ox * dy - oy * dx) * s_m


def _pick_tile_rows(r_total, rows_per_tile):
    """Choose the tile row count.

    - capped at MAX_TILE_ROWS so double-buffered in+out stays inside the 32 MiB
      scoped-VMEM budget on every generation (incl. v7x's 64 MiB physical VMEM);
    - aims for a grid of >= 2 steps so v7x's 2 TensorCores both get work on the
      "parallel" axis;
    - multiple of 8 (sublane constraint) unless it equals the full extent.
    """
    rows_per_tile = min(int(rows_per_tile), MAX_TILE_ROWS)
    rows_per_tile = max(_round_up(rows_per_tile, 8), 8)
    half = max(_round_up(pl.cdiv(r_total, 2), 8), 8)
    tr = min(rows_per_tile, half, r_total)
    if tr != r_total:
        tr = max(_round_up(tr, 8), 8)
    return tr


def ray_param_pluecker_channel_major(rays_cm, *, rows_per_tile=DEFAULT_TILE_ROWS):
    """Core entry point: rays_cm is (6, R, 128) f32, R a multiple of 8.

    Use this directly if the producer/consumer can keep rays channel-major —
    it avoids the (N,6)<->(6,N) transpose HBM passes entirely (the dominant
    end-to-end cost around this bandwidth-bound kernel).
    """
    c, r_total, lane = rays_cm.shape
    assert c == 6 and lane == LANE
    assert r_total % 8 == 0, "channel-major rows must be a multiple of 8"

    tr = _pick_tile_rows(r_total, rows_per_tile)
    grid = pl.cdiv(r_total, tr)   # ragged last block handled by Pallas

    kernel = functools.partial(
        _pluecker_kernel,
        origin=ORIGIN,
        dir_mul=DIRECTION_MULTIPLIER,
        mom_mul=MOMENT_MULTIPLIER,
    )

    return pl.pallas_call(
        kernel,
        out_shape=jax.ShapeDtypeStruct((6, r_total, LANE), jnp.float32),
        grid_spec=pltpu.PrefetchScalarGridSpec(
            num_scalar_prefetch=0,
            grid=(grid,),
            # Plain double buffering: at >=512-row tiles per-step DMA (>=1.5 MiB)
            # already hides the fixed step overhead; deeper buffering adds VMEM
            # that doesn't port to v7x for ~0 gain.
            in_specs=[pl.BlockSpec((6, tr, LANE), lambda i: (0, i, 0))],
            out_specs=pl.BlockSpec((6, tr, LANE), lambda i: (0, i, 0)),
        ),
        compiler_params=pltpu.CompilerParams(
            dimension_semantics=("parallel",),
            vmem_limit_bytes=VMEM_LIMIT_BYTES,
        ),
    )(rays_cm)


def ray_param_pluecker(x, *, rows_per_tile=DEFAULT_TILE_ROWS):
    """RayParam.forward with cfg.fn='pluecker'.

    x: (N, 6) float32 rays [origin(3), direction(3)]  ->  (N, 6) float32

    Convenience wrapper keeping the PyTorch (N, 6) convention; the pad /
    transpose / reshape passes here are XLA-side layout plumbing and roughly
    triple HBM traffic around the kernel — if the surrounding pipeline can keep
    rays channel-major, call `ray_param_pluecker_channel_major` directly.
    Rows are padded only to a multiple of 8 (never to the tile size), so the
    padding waste is bounded at <1024 rays regardless of tile size.
    """
    n, c = x.shape
    assert c == 6, "pluecker param expects 6 input channels"

    r_needed = pl.cdiv(max(n, 1), LANE)
    r_total = _round_up(r_needed, 8)          # sublane constraint only
    n_total = r_total * LANE

    xf = x.astype(jnp.float32)
    if n_total != n:
        xf = jnp.pad(xf, ((0, n_total - n), (0, 0)))
    rays_cm = xf.T.reshape(6, r_total, LANE)  # (6, R, 128) channel-major

    out_cm = ray_param_pluecker_channel_major(rays_cm, rows_per_tile=rows_per_tile)

    out = out_cm.reshape(6, n_total).T        # (N_padded, 6)
    return out[:n]


def _reference(x):
    origin = jnp.asarray(ORIGIN, jnp.float32)
    rays_o = x[..., :3] - origin
    rays_d = x[..., 3:6]
    norm = jnp.sqrt(jnp.sum(rays_d * rays_d, axis=-1, keepdims=True))
    rays_d = rays_d / jnp.maximum(norm, EPS)
    m = jnp.cross(rays_o, rays_d)
    return jnp.concatenate(
        [rays_d * DIRECTION_MULTIPLIER, m * MOMENT_MULTIPLIER], axis=-1
    )


if __name__ == "__main__":
    key = jax.random.PRNGKey(0)

    # 1) Small, non-128-multiple N exercises the padded-tail path (single tile,
    #    block == full extent).
    n1 = 300
    x1 = jax.random.normal(key, (n1, 6), dtype=jnp.float32)
    out1 = ray_param_pluecker(x1)
    jax.block_until_ready(out1)
    ref1 = _reference(x1)
    assert out1.shape == (n1, 6)
    assert jnp.allclose(out1, ref1, atol=1e-5, rtol=1e-5), "mismatch (n=300)"

    # 2) Multi-step grid path: 2048 rays -> R=16 rows, tr=8 (>=2 grid steps).
    n2 = 2048
    x2 = jax.random.normal(jax.random.PRNGKey(1), (n2, 6), dtype=jnp.float32)
    out2 = ray_param_pluecker(x2)
    jax.block_until_ready(out2)
    ref2 = _reference(x2)
    assert out2.shape == (n2, 6)
    assert jnp.allclose(out2, ref2, atol=1e-5, rtol=1e-5), "mismatch (n=2048)"

    # 3) Ragged last grid block: R=40 rows, tr=24 -> grid=2 with a partial tile.
    n3 = 40 * LANE - 37
    x3 = jax.random.normal(jax.random.PRNGKey(2), (n3, 6), dtype=jnp.float32)
    out3 = ray_param_pluecker(x3)
    jax.block_until_ready(out3)
    ref3 = _reference(x3)
    assert out3.shape == (n3, 6)
    assert jnp.allclose(out3, ref3, atol=1e-5, rtol=1e-5), "mismatch (ragged tile)"

    # 4) Channel-major fast path used directly (no wrapper transposes).
    rays_cm = x2.T.reshape(6, n2 // LANE, LANE)
    out_cm = ray_param_pluecker_channel_major(rays_cm)
    jax.block_until_ready(out_cm)
    ref_cm = _reference(x2).T.reshape(6, n2 // LANE, LANE)
    assert out_cm.shape == (6, n2 // LANE, LANE)
    assert jnp.allclose(out_cm, ref_cm, atol=1e-5, rtol=1e-5), "mismatch (channel-major)"

    print("KERNEL_OK")
</pallas_src>

<mosaic_0001>
module attributes {stable_mosaic.version = 11 : i64} {
  func.func @_pluecker_kernel(%arg0: i32, %arg1: memref<6x8x128xf32, #tpu.memory_space<vmem>>, %arg2: memref<6x8x128xf32, #tpu.memory_space<vmem>>) attributes {dimension_semantics = [#tpu.dimension_semantics<parallel>], iteration_bounds = array<i64: 1>, scalar_prefetch = 0 : i64, scratch_operands = 0 : i64, tpu.core_type = #tpu.core_type<tc>, window_params = [{transform_indices = @transform_0, window_bounds = array<i64: 6, 8, 128>}, {transform_indices = @transform_1, window_bounds = array<i64: 6, 8, 128>}]} {
    %c0 = arith.constant 0 : index
    %c0_0 = arith.constant 0 : index
    %c0_1 = arith.constant 0 : index
    %0 = vector.load %arg1[%c0, %c0_0, %c0_1] : memref<6x8x128xf32, #tpu.memory_space<vmem>>, vector<1x8x128xf32>
    %1 = vector.shape_cast %0 : vector<1x8x128xf32> to vector<8x128xf32>
    %cst = arith.constant 1.000000e-01 : f32
    %2 = vector.broadcast %cst : f32 to vector<8x128xf32>
    %3 = arith.subf %1, %2 : vector<8x128xf32>
    %c1 = arith.constant 1 : index
    %c0_2 = arith.constant 0 : index
    %c0_3 = arith.constant 0 : index
    %4 = vector.load %arg1[%c1, %c0_2, %c0_3] : memref<6x8x128xf32, #tpu.memory_space<vmem>>, vector<1x8x128xf32>
    %5 = vector.shape_cast %4 : vector<1x8x128xf32> to vector<8x128xf32>
    %cst_4 = arith.constant -2.000000e-01 : f32
    %6 = vector.broadcast %cst_4 : f32 to vector<8x128xf32>
    %7 = arith.subf %5, %6 : vector<8x128xf32>
    %c2 = arith.constant 2 : index
    %c0_5 = arith.constant 0 : index
    %c0_6 = arith.constant 0 : index
    %8 = vector.load %arg1[%c2, %c0_5, %c0_6] : memref<6x8x128xf32, #tpu.memory_space<vmem>>, vector<1x8x128xf32>
    %9 = vector.shape_cast %8 : vector<1x8x128xf32> to vector<8x128xf32>
    %cst_7 = arith.constant 3.000000e-01 : f32
    %10 = vector.broadcast %cst_7 : f32 to vector<8x128xf32>
    %11 = arith.subf %9, %10 : vector<8x128xf32>
    %c3 = arith.constant 3 : index
    %c0_8 = arith.constant 0 : index
    %c0_9 = arith.constant 0 : index
    %12 = vector.load %arg1[%c3, %c0_8, %c0_9] : memref<6x8x128xf32, #tpu.memory_space<vmem>>, vector<1x8x128xf32>
    %13 = vector.shape_cast %12 : vector<1x8x128xf32> to vector<8x128xf32>
    %c4 = arith.constant 4 : index
    %c0_10 = arith.constant 0 : index
    %c0_11 = arith.constant 0 : index
    %14 = vector.load %arg1[%c4, %c0_10, %c0_11] : memref<6x8x128xf32, #tpu.memory_space<vmem>>, vector<1x8x128xf32>
    %15 = vector.shape_cast %14 : vector<1x8x128xf32> to vector<8x128xf32>
    %c5 = arith.constant 5 : index
    %c0_12 = arith.constant 0 : index
    %c0_13 = arith.constant 0 : index
    %16 = vector.load %arg1[%c5, %c0_12, %c0_13] : memref<6x8x128xf32, #tpu.memory_space<vmem>>, vector<1x8x128xf32>
    %17 = vector.shape_cast %16 : vector<1x8x128xf32> to vector<8x128xf32>
    %18 = arith.mulf %13, %13 : vector<8x128xf32>
    %19 = arith.mulf %15, %15 : vector<8x128xf32>
    %20 = arith.addf %18, %19 : vector<8x128xf32>
    %21 = arith.mulf %17, %17 : vector<8x128xf32>
    %22 = arith.addf %20, %21 : vector<8x128xf32>
    %cst_14 = arith.constant 1.000000e-24 : f32
    %23 = vector.broadcast %cst_14 : f32 to vector<8x128xf32>
    %24 = arith.maximumf %22, %23 : vector<8x128xf32>
    %25 = math.rsqrt %24 : vector<8x128xf32>
    %cst_15 = arith.constant 1.500000e+00 : f32
    %26 = vector.broadcast %cst_15 : f32 to vector<8x128xf32>
    %27 = arith.mulf %25, %26 : vector<8x128xf32>
    %cst_16 = arith.constant 7.500000e-01 : f32
    %28 = vector.broadcast %cst_16 : f32 to vector<8x128xf32>
    %29 = arith.mulf %25, %28 : vector<8x128xf32>
    %30 = arith.mulf %13, %27 : vector<8x128xf32>
    %c0_17 = arith.constant 0 : index
    %c0_18 = arith.constant 0 : index
    %c0_19 = arith.constant 0 : index
    %31 = vector.load %arg2[%c0_17, %c0_18, %c0_19] : memref<6x8x128xf32, #tpu.memory_space<vmem>>, vector<1x8x128xf32>
    %32 = vector.shape_cast %31 : vector<1x8x128xf32> to vector<8x128xf32>
    %33 = vector.shape_cast %30 : vector<8x128xf32> to vector<1x8x128xf32>
    tpu.vector_store %arg2[%c0_17, %c0_18, %c0_19], %33 {strides = array<i32>} : memref<6x8x128xf32, #tpu.memory_space<vmem>>, vector<1x8x128xf32>,
    %34 = arith.mulf %15, %27 : vector<8x128xf32>
    %c1_20 = arith.constant 1 : index
    %c0_21 = arith.constant 0 : index
    %c0_22 = arith.constant 0 : index
    %35 = vector.load %arg2[%c1_20, %c0_21, %c0_22] : memref<6x8x128xf32, #tpu.memory_space<vmem>>, vector<1x8x128xf32>
    %36 = vector.shape_cast %35 : vector<1x8x128xf32> to vector<8x128xf32>
    %37 = vector.shape_cast %34 : vector<8x128xf32> to vector<1x8x128xf32>
    tpu.vector_store %arg2[%c1_20, %c0_21, %c0_22], %37 {strides = array<i32>} : memref<6x8x128xf32, #tpu.memory_space<vmem>>, vector<1x8x128xf32>,
    %38 = arith.mulf %17, %27 : vector<8x128xf32>
    %c2_23 = arith.constant 2 : index
    %c0_24 = arith.constant 0 : index
    %c0_25 = arith.constant 0 : index
    %39 = vector.load %arg2[%c2_23, %c0_24, %c0_25] : memref<6x8x128xf32, #tpu.memory_space<vmem>>, vector<1x8x128xf32>
    %40 = vector.shape_cast %39 : vector<1x8x128xf32> to vector<8x128xf32>
    %41 = vector.shape_cast %38 : vector<8x128xf32> to vector<1x8x128xf32>
    tpu.vector_store %arg2[%c2_23, %c0_24, %c0_25], %41 {strides = array<i32>} : memref<6x8x128xf32, #tpu.memory_space<vmem>>, vector<1x8x128xf32>,
    %42 = arith.mulf %7, %17 : vector<8x128xf32>
    %43 = arith.mulf %11, %15 : vector<8x128xf32>
    %44 = arith.subf %42, %43 : vector<8x128xf32>
    %45 = arith.mulf %44, %29 : vector<8x128xf32>
    %c3_26 = arith.constant 3 : index
    %c0_27 = arith.constant 0 : index
    %c0_28 = arith.constant 0 : index
    %46 = vector.load %arg2[%c3_26, %c0_27, %c0_28] : memref<6x8x128xf32, #tpu.memory_space<vmem>>, vector<1x8x128xf32>
    %47 = vector.shape_cast %46 : vector<1x8x128xf32> to vector<8x128xf32>
    %48 = vector.shape_cast %45 : vector<8x128xf32> to vector<1x8x128xf32>
    tpu.vector_store %arg2[%c3_26, %c0_27, %c0_28], %48 {strides = array<i32>} : memref<6x8x128xf32, #tpu.memory_space<vmem>>, vector<1x8x128xf32>,
    %49 = arith.mulf %11, %13 : vector<8x128xf32>
    %50 = arith.mulf %3, %17 : vector<8x128xf32>
    %51 = arith.subf %49, %50 : vector<8x128xf32>
    %52 = arith.mulf %51, %29 : vector<8x128xf32>
    %c4_29 = arith.constant 4 : index
    %c0_30 = arith.constant 0 : index
    %c0_31 = arith.constant 0 : index
    %53 = vector.load %arg2[%c4_29, %c0_30, %c0_31] : memref<6x8x128xf32, #tpu.memory_space<vmem>>, vector<1x8x128xf32>
    %54 = vector.shape_cast %53 : vector<1x8x128xf32> to vector<8x128xf32>
    %55 = vector.shape_cast %52 : vector<8x128xf32> to vector<1x8x128xf32>
    tpu.vector_store %arg2[%c4_29, %c0_30, %c0_31], %55 {strides = array<i32>} : memref<6x8x128xf32, #tpu.memory_space<vmem>>, vector<1x8x128xf32>,
    %56 = arith.mulf %3, %15 : vector<8x128xf32>
    %57 = arith.mulf %7, %13 : vector<8x128xf32>
    %58 = arith.subf %56, %57 : vector<8x128xf32>
    %59 = arith.mulf %58, %29 : vector<8x128xf32>
    %c5_32 = arith.constant 5 : index
    %c0_33 = arith.constant 0 : index
    %c0_34 = arith.constant 0 : index
    %60 = vector.load %arg2[%c5_32, %c0_33, %c0_34] : memref<6x8x128xf32, #tpu.memory_space<vmem>>, vector<1x8x128xf32>
    %61 = vector.shape_cast %60 : vector<1x8x128xf32> to vector<8x128xf32>
    %62 = vector.shape_cast %59 : vector<8x128xf32> to vector<1x8x128xf32>
    tpu.vector_store %arg2[%c5_32, %c0_33, %c0_34], %62 {strides = array<i32>} : memref<6x8x128xf32, #tpu.memory_space<vmem>>, vector<1x8x128xf32>,
    return
  }
  func.func @transform_0(%arg0: i32) -> (i32, i32, i32) {
    %c0_i32 = arith.constant 0 : i32
    %c0_i32_0 = arith.constant 0 : i32
    %c0_i32_1 = arith.constant 0 : i32
    return %c0_i32, %arg0, %c0_i32_0 : i32, i32, i32
  }
  func.func @transform_1(%arg0: i32) -> (i32, i32, i32) {
    %c0_i32 = arith.constant 0 : i32
    %c0_i32_0 = arith.constant 0 : i32
    %c0_i32_1 = arith.constant 0 : i32
    return %c0_i32, %arg0, %c0_i32_0 : i32, i32, i32
  }
}

</mosaic_0001>

<llo_original>
// kernel: tpu_custom_call.1
$region0: #{tpu_custom_call.1}
  #allocation0 [shape = 'u32[]', space=smem, size = 0x4, offset = 0x4, fixed_abs, tag = 'smem constant byte address 0x4 - core index']
  #allocation1 [shape = 'u32[144,128]{1,0:T(1,128)}', space=vmem, size = 0x12000, scoped, tag = 'internal scratch']
  %s0 = inlined_call_operand.hbm [shape: f32[6,8,128], index: 0, kind: input, shape index: {}]
  %s1 = inlined_call_operand.hbm [shape: f32[6,8,128], index: 1, kind: output, shape index: {}]
  %s2 = sld [smem:[#allocation0]]
  $region18: #{tpu_custom_call.1} parent=0
    _
  %s4 = ssub.s32 1, %s2
  %s5 = scalar_select 0, %s4, %s2
  $region1: #{tpu_custom_call.1} parent=0
    #allocation2 [shape = 'u8[24576]{0}', space=vmem, size = 0x6000, scoped, tag = 'input window, operand 0, single buffered']
    #allocation3 [shape = 's32[1]{0}', space=sflag, size = 0x4, scoped, tag = 'scoped memory for tpu_custom_call.1']
    #allocation4 [shape = 's32[1]{0}', space=sflag, size = 0x4, scoped, tag = 'scoped memory for tpu_custom_call.1']
    #allocation5 [shape = 'u8[24576]{0}', space=vmem, size = 0x6000, scoped, tag = 'output window, operand 0, single buffered']
    %6 = vsyncpa [#allocation3], 0
    %7 = vsyncpa [#allocation4], 0
    // Predicated region
    $region2: #{tpu_custom_call.1} parent=1 // pred_check
      _
    $region3: #{tpu_custom_call.1} parent=1 // pred_check_branch
      %9 = sbr.rel (0) target = $region5
    $region4: #{tpu_custom_call.1} parent=1 // pred_region
      %s11 = ssub.s32 768, 768
      %12 = vsyncadd [#allocation3], %s11
      %s13 = sshll.u32 [#allocation2], 4
      %s14 = int_to_ptr.vmem [resolvable:$true] %s13
      %19 = dma.hbm_to_vmem [thread:$0]  %s0, 768, %s14, [#allocation3], 128, 128, 8
    $region5: #{tpu_custom_call.1} parent=1 // pred_fallthru
      _
    // Predicated region
    $region6: #{tpu_custom_call.1} parent=1 // pred_check
      _
    $region7: #{tpu_custom_call.1} parent=1 // pred_check_branch
      %21 = sbr.rel (0) target = $region9
    $region8: #{tpu_custom_call.1} parent=1 // pred_region
      %22 = dma.done [#allocation3], 768
    $region9: #{tpu_custom_call.1} parent=1 // pred_fallthru
      _
    %v23 = vld [vmem:[#allocation2] sm:$0xff]
    %v24 = vsub.f32 %v23, 0.1
    %s25 = scalar_lea.vmem [#allocation2], 8
    %v26 = vld [vmem:[%s25] sm:$0xff]
    %v27 = vsub.f32 %v26, -0.2
    %s28 = scalar_lea.vmem [#allocation2], 16
    %v29 = vld [vmem:[%s28] sm:$0xff]
    %v30 = vsub.f32 %v29, 0.3
    %s31 = scalar_lea.vmem [#allocation2], 24
    %v32 = vld [vmem:[%s31] sm:$0xff]
    %s33 = scalar_lea.vmem [#allocation2], 32
    %v34 = vld [vmem:[%s33] sm:$0xff]
    %s35 = scalar_lea.vmem [#allocation2], 40
    %v36 = vld [vmem:[%s35] sm:$0xff]
    %v37 = vmul.f32 %v32, %v32
    %v38 = vmul.f32 %v34, %v34
    %v39 = vadd.f32 %v37, %v38
    %v40 = vmul.f32 %v36, %v36
    %v41 = vadd.f32 %v39, %v40
    %v42 = vmax.f32 %v41, 1e-24
    %v43 = vrsqrt.pop %v42
    %v44 = vmul.f32 %v43, 1.5
    %v45 = vmul.f32 %v43, 0.75
    %v46 = vmul.f32 %v32, %v44
    %47 = vst [vmem:[#allocation5] sm:$0xff] %v46
    %v48 = vmul.f32 %v34, %v44
    %s49 = scalar_lea.vmem [#allocation5], 8
    %50 = vst [vmem:[%s49] sm:$0xff] %v48
    %v51 = vmul.f32 %v36, %v44
    %s52 = scalar_lea.vmem [#allocation5], 16
    %53 = vst [vmem:[%s52] sm:$0xff] %v51
    %v54 = vmul.f32 %v27, %v36
    %v55 = vmul.f32 %v30, %v34
    %v56 = vsub.f32 %v54, %v55
    %v57 = vmul.f32 %v56, %v45
    %s58 = scalar_lea.vmem [#allocation5], 24
    %59 = vst [vmem:[%s58] sm:$0xff] %v57
    %v60 = vmul.f32 %v30, %v32
    %v61 = vmul.f32 %v24, %v36
    %v62 = vsub.f32 %v60, %v61
    %v63 = vmul.f32 %v62, %v45
    %s64 = scalar_lea.vmem [#allocation5], 32
    %65 = vst [vmem:[%s64] sm:$0xff] %v63
    %v66 = vmul.f32 %v24, %v34
    %v67 = vmul.f32 %v27, %v32
    %v68 = vsub.f32 %v66, %v67
    %v69 = vmul.f32 %v68, %v45
    %s70 = scalar_lea.vmem [#allocation5], 40
    %71 = vst [vmem:[%s70] sm:$0xff] %v69
    // Predicated region
    $region10: #{tpu_custom_call.1} parent=1 // pred_check
      _
    $region11: #{tpu_custom_call.1} parent=1 // pred_check_branch
      %73 = sbr.rel (0) target = $region13
    $region12: #{tpu_custom_call.1} parent=1 // pred_region
      %s75 = ssub.s32 768, 768
      %76 = vsyncadd [#allocation4], %s75
      %s77 = sshll.u32 [#allocation5], 4
      %s78 = int_to_ptr.vmem [resolvable:$true] %s77
      %83 = dma.vmem_to_hbm [thread:$0]  %s78, 768, %s1, [#allocation4], 128, 128, 8
    $region13: #{tpu_custom_call.1} parent=1 // pred_fallthru
      _
    // Predicated region
    $region14: #{tpu_custom_call.1} parent=1 // pred_check
      _
    $region15: #{tpu_custom_call.1} parent=1 // pred_check_branch
      %85 = sbr.rel (0) target = $region17
    $region16: #{tpu_custom_call.1} parent=1 // pred_region
      %86 = dma.done [#allocation4], 768
    $region17: #{tpu_custom_call.1} parent=1 // pred_fallthru
      _
    %87 = vsyncpa [#allocation3], 1
    %88 = vsyncpa [#allocation4], 1

</llo_original>
